<compile_context>
chip_gen: v5e
topology: v5e:2x2
jax: 0.10.0
libtpu: 0.0.40
codegen_flags: <defaults>
</compile_context>

<pallas_src>
import math
from functools import partial

import numpy as np

import jax
import jax.numpy as jnp
from jax.experimental import pallas as pl
from jax.experimental.pallas import tpu as pltpu

BN_EPS = 1e-5


def _round_up(x, m):
    return (x + m - 1) // m * m


def _device_kind():
    try:
        return jax.devices()[0].device_kind.lower()
    except Exception:
        return ""


_KIND = _device_kind()
_WIDE_MXU = any(t in _KIND for t in ("v6", "v7", "7x"))   # 256-wide MXU (v6e/v7x)
_MULTI_TC = any(t in _KIND for t in ("v7", "7x"))         # 2 TensorCores / chip
TM_MAX = 256 if _WIDE_MXU else 128
TN_MAX = 256 if _WIDE_MXU else 128


# ----------------------------------------------------------------------------
# Pallas kernels: fused (A @ B) * scale + bias [+ residual] -> optional ReLU
# Full-K contraction per grid step; 2-D (M, N) grid, both axes parallel.
# ----------------------------------------------------------------------------
def _mm_kernel(a_ref, b_ref, sb_ref, o_ref, *, relu):
    y = jnp.dot(a_ref[...], b_ref[...], preferred_element_type=jnp.float32)
    sb = sb_ref[...]                       # (2, tn): row0 = scale, row1 = bias
    y = y * sb[0:1, :] + sb[1:2, :]
    if relu:
        y = jnp.maximum(y, 0.0)
    o_ref[...] = y.astype(o_ref.dtype)


def _mm_res_kernel(a_ref, b_ref, sb_ref, r_ref, o_ref, *, relu):
    y = jnp.dot(a_ref[...], b_ref[...], preferred_element_type=jnp.float32)
    sb = sb_ref[...]
    y = y * sb[0:1, :] + sb[1:2, :] + r_ref[...].astype(jnp.float32)
    if relu:
        y = jnp.maximum(y, 0.0)
    o_ref[...] = y.astype(o_ref.dtype)


def _pick_tm(M):
    for tm in (TM_MAX, 128, 64, 32, 16):
        if tm <= TM_MAX and M % tm == 0:
            return tm, M
    tm = min(TM_MAX, _round_up(M, 16))
    return tm, _round_up(M, tm)


def _fused_matmul(a, wp, sb, residual, relu, n_out):
    """relu_maybe((a @ wp) * scale + bias [+ residual]) -> bf16 (Mp, Np)."""
    M, K = a.shape
    Kp, Np = wp.shape
    tm, Mp = _pick_tm(M)
    if a.dtype != jnp.bfloat16:
        a = a.astype(jnp.bfloat16)
    if Mp != M or Kp != K:
        a = jnp.pad(a, ((0, Mp - M), (0, Kp - K)))   # zero-pad (keeps K exact)
    gm = Mp // tm

    tn = TN_MAX if Np % TN_MAX == 0 else 128
    if _MULTI_TC and gm == 1 and Np // tn == 1 and Np >= 256:
        tn = 128                                     # keep both TCs busy on v7x
    gn = Np // tn

    in_specs = [
        pl.BlockSpec((tm, Kp), lambda i, j: (i, 0)),
        pl.BlockSpec((Kp, tn), lambda i, j: (0, j)),
        pl.BlockSpec((2, tn), lambda i, j: (0, j)),
    ]
    args = [a, wp, sb]
    if residual is not None:
        r = residual.reshape(M, n_out)
        if r.dtype != jnp.bfloat16:
            r = r.astype(jnp.bfloat16)
        if Mp != M or Np != n_out:
            r = jnp.pad(r, ((0, Mp - M), (0, Np - n_out)))
        in_specs.append(pl.BlockSpec((tm, tn), lambda i, j: (i, j)))
        args.append(r)
        kernel = partial(_mm_res_kernel, relu=relu)
    else:
        kernel = partial(_mm_kernel, relu=relu)

    out = pl.pallas_call(
        kernel,
        out_shape=jax.ShapeDtypeStruct((Mp, Np), jnp.bfloat16),
        grid=(gm, gn),
        in_specs=in_specs,
        out_specs=pl.BlockSpec((tm, tn), lambda i, j: (i, j)),
        compiler_params=pltpu.CompilerParams(
            dimension_semantics=("parallel", "parallel")),
    )(*args)
    if Mp != M or Np != n_out:
        out = out[:M, :n_out]
    return out


# ----------------------------------------------------------------------------
# im2col glue + jitted conv/deconv wrappers (Pallas matmul is the hot path)
# ----------------------------------------------------------------------------
def _im2col(x, kh, kw, stride, padding):
    B, H, W, C = x.shape
    sh = sw = stride
    ph = pw = padding
    xp = jnp.pad(x, ((0, 0), (ph, ph), (pw, pw), (0, 0)))
    Ho = (H + 2 * ph - kh) // sh + 1
    Wo = (W + 2 * pw - kw) // sw + 1
    cols = []
    for i in range(kh):
        for j in range(kw):
            cols.append(xp[:, i:i + sh * (Ho - 1) + 1:sh,
                           j:j + sw * (Wo - 1) + 1:sw, :])
    a = jnp.concatenate(cols, axis=-1)  # (B, Ho, Wo, kh*kw*C)
    return a.reshape(B * Ho * Wo, kh * kw * C), (B, Ho, Wo)


@partial(jax.jit, static_argnames=("kh", "kw", "stride", "padding",
                                   "relu", "n_out", "has_res"))
def conv2d_prepared(x, wp, sb, residual, *, kh, kw, stride, padding,
                    relu, n_out, has_res):
    B, H, W, C = x.shape
    if kh == 1 and kw == 1 and padding == 0:
        xs = x if stride == 1 else x[:, ::stride, ::stride, :]
        Ho, Wo = xs.shape[1], xs.shape[2]
        a = xs.reshape(B * Ho * Wo, C)          # no im2col / no copy
    else:
        a, (B, Ho, Wo) = _im2col(x, kh, kw, stride, padding)
    res = residual if has_res else None
    out = _fused_matmul(a, wp, sb, res, relu, n_out)
    return out.reshape(B, Ho, Wo, n_out)


@partial(jax.jit, static_argnames=("n_out",))
def deconv_k4s2p1_prepared(x, wp, sb, *, n_out):
    """ConvTranspose2d(k=4,s=2,p=1) + BN + ReLU as one 3x3 pixel-shuffle conv."""
    a, (B, H, W) = _im2col(x, 3, 3, 1, 1)
    out = _fused_matmul(a, wp, sb, None, True, 4 * n_out)
    y = out.reshape(B, H, W, 2, 2, n_out)            # (.., rh, rw, C)
    y = jnp.transpose(y, (0, 1, 3, 2, 4, 5)).reshape(B, 2 * H, 2 * W, n_out)
    return y


@partial(jax.jit, static_argnames=("n_out",))
def deconv_k3s2p0_prepared(x, wp, sb, *, n_out):
    """ConvTranspose2d(k=3,s=2,p=0) + ReLU as one 2x2 pixel-shuffle conv."""
    a, (B, Hp, Wp) = _im2col(x, 2, 2, 1, 1)          # Hp = H+1, Wp = W+1
    out = _fused_matmul(a, wp, sb, None, True, 4 * n_out)
    y = out.reshape(B, Hp, Wp, 2, 2, n_out)
    y = jnp.transpose(y, (0, 1, 3, 2, 4, 5)).reshape(B, 2 * Hp, 2 * Wp, n_out)
    H, W = Hp - 1, Wp - 1
    return y[:, :2 * H + 1, :2 * W + 1, :]           # output is (2H+1, 2W+1)


def max_pool_3x3_s2_p1(x):
    # TODO(synk): maxpool kept as plain-JAX reduce_window (not the matmul hot path).
    return jax.lax.reduce_window(
        x, jnp.asarray(-jnp.inf, x.dtype), jax.lax.max,
        window_dimensions=(1, 3, 3, 1),
        window_strides=(1, 2, 2, 1),
        padding=((0, 0), (1, 1), (1, 1), (0, 0)))


# ----------------------------------------------------------------------------
# Deterministic raw parameter construction (shapes match torchvision resnet152
# + the LinkNet decoders of the reference module)
# ----------------------------------------------------------------------------
class KeyGen:
    def __init__(self, seed=0):
        self._key = jax.random.PRNGKey(seed)

    def __call__(self):
        self._key, k = jax.random.split(self._key)
        return k


def init_conv(kg, o, i, kh, kw, bias=False):
    fan_in = i * kh * kw
    w = jax.random.normal(kg(), (o, i, kh, kw), jnp.float32) / math.sqrt(fan_in)
    b = 0.01 * jax.random.normal(kg(), (o,), jnp.float32) if bias else None
    return {"w": w, "b": b}


def init_deconv(kg, i, o, kh, kw, bias=True):
    fan_in = i * kh * kw
    w = jax.random.normal(kg(), (i, o, kh, kw), jnp.float32) / math.sqrt(fan_in)
    b = 0.01 * jax.random.normal(kg(), (o,), jnp.float32) if bias else None
    return {"w": w, "b": b}


def init_bn(kg, c):
    gamma = 1.0 + 0.01 * jax.random.normal(kg(), (c,), jnp.float32)
    beta = 0.01 * jax.random.normal(kg(), (c,), jnp.float32)
    mean = 0.01 * jax.random.normal(kg(), (c,), jnp.float32)
    var = 1.0 + 0.01 * jnp.abs(jax.random.normal(kg(), (c,), jnp.float32))
    return (gamma, beta, mean, var)


def init_bottleneck(kg, in_c, width, stride, downsample):
    p = {
        "stride": stride,
        "conv1": init_conv(kg, width, in_c, 1, 1),
        "bn1": init_bn(kg, width),
        "conv2": init_conv(kg, width, width, 3, 3),
        "bn2": init_bn(kg, width),
        "conv3": init_conv(kg, width * 4, width, 1, 1),
        "bn3": init_bn(kg, width * 4),
    }
    if downsample:
        p["down_conv"] = init_conv(kg, width * 4, in_c, 1, 1)
        p["down_bn"] = init_bn(kg, width * 4)
    return p


def init_layer(kg, in_c, width, blocks, stride):
    layer = [init_bottleneck(kg, in_c, width, stride, True)]
    for _ in range(blocks - 1):
        layer.append(init_bottleneck(kg, width * 4, width, 1, False))
    return layer


def init_decoder(kg, in_c, n_filters):
    mid = in_c // 4
    return {
        "conv1": init_conv(kg, mid, in_c, 1, 1, bias=True),
        "bn1": init_bn(kg, mid),
        "deconv2": init_deconv(kg, mid, mid, 4, 4, bias=True),
        "bn2": init_bn(kg, mid),
        "conv3": init_conv(kg, n_filters, mid, 1, 1, bias=True),
        "bn3": init_bn(kg, n_filters),
    }


def init_linknet152(kg, num_classes=1, num_channels=3):
    filters = [256, 512, 1024, 2048]
    return {
        "firstconv": init_conv(kg, 64, num_channels, 7, 7),
        "firstbn": init_bn(kg, 64),
        "layer1": init_layer(kg, 64, 64, 3, 1),
        "layer2": init_layer(kg, 256, 128, 8, 2),
        "layer3": init_layer(kg, 512, 256, 36, 2),
        "layer4": init_layer(kg, 1024, 512, 3, 2),
        "decoder4": init_decoder(kg, filters[3], filters[2]),
        "decoder3": init_decoder(kg, filters[2], filters[1]),
        "decoder2": init_decoder(kg, filters[1], filters[0]),
        "decoder1": init_decoder(kg, filters[0], filters[0]),
        "decoder0": init_decoder(kg, filters[0], 64),  # unused in forward (matches PyTorch)
        "finaldeconv1": init_deconv(kg, filters[0], 32, 3, 3, bias=True),
        "finalconv2": init_conv(kg, 32, 32, 3, 3, bias=True),
        "finalconv3": init_conv(kg, num_classes, 32, 2, 2, bias=True),
    }


# ----------------------------------------------------------------------------
# One-time weight preparation: fold BN, repack to (K,N), pad, cast to bf16
# ----------------------------------------------------------------------------
def _fold_bn(n_out, conv_bias, bn):
    b = conv_bias if conv_bias is not None else jnp.zeros((n_out,), jnp.float32)
    if bn is None:
        return jnp.ones((n_out,), jnp.float32), b
    gamma, beta, mean, var = bn
    inv = gamma / jnp.sqrt(var + BN_EPS)
    return inv, (b - mean) * inv + beta


def _pack_matmul(wm, scale, bias):
    K, N = wm.shape
    Kp = _round_up(K, 16)          # sublane-friendly; TK is always the full K
    Np = _round_up(N, 128)
    wp = jnp.pad(wm, ((0, Kp - K), (0, Np - N))).astype(jnp.bfloat16)
    sb = jnp.stack([jnp.pad(scale.astype(jnp.float32), (0, Np - N)),
                    jnp.pad(bias.astype(jnp.float32), (0, Np - N))])
    return {"wp": wp, "sb": sb}


def prep_conv2d(conv, bn):
    w = conv["w"]                               # (O, Ci, kh, kw)
    O, Ci, kh, kw = w.shape
    wm = jnp.transpose(w, (2, 3, 1, 0)).reshape(kh * kw * Ci, O)
    scale, bias = _fold_bn(O, conv["b"], bn)
    packed = _pack_matmul(wm, scale, bias)
    packed.update(kh=kh, kw=kw, n_out=O)
    return packed


def prep_deconv_k4s2p1(deconv, bn):
    """Pack ConvTranspose2d(k=4,s=2,p=1) as a 3x3 pixel-shuffle conv weight.

    Output phase rh at row 2m+rh reads taps th over [x[m-1], x[m], x[m+1]]:
      rh=0: th0->kh3, th1->kh1 ; rh=1: th1->kh2, th2->kh0  (same for width).
    """
    w = np.asarray(deconv["w"])                 # (Ci, Co, 4, 4)
    Ci, Co = w.shape[0], w.shape[1]
    kmap = {(0, 0): 3, (0, 1): 1, (1, 1): 2, (1, 2): 0}
    wm = np.zeros((9 * Ci, 4 * Co), np.float32)
    for th in range(3):
        for tw in range(3):
            for rh in range(2):
                for rw in range(2):
                    if (rh, th) in kmap and (rw, tw) in kmap:
                        kh_, kw_ = kmap[(rh, th)], kmap[(rw, tw)]
                        ph = rh * 2 + rw
                        wm[(th * 3 + tw) * Ci:(th * 3 + tw + 1) * Ci,
                           ph * Co:(ph + 1) * Co] = w[:, :, kh_, kw_]
    scale, bias = _fold_bn(Co, deconv["b"], bn)
    packed = _pack_matmul(jnp.asarray(wm), jnp.tile(scale, 4), jnp.tile(bias, 4))
    packed["n_out"] = Co
    return packed


def prep_deconv_k3s2p0(deconv, bn):
    """Pack ConvTranspose2d(k=3,s=2,p=0) as a 2x2 pixel-shuffle conv weight.

    With the input padded by 1 each side, the window at m reads [x[m-1], x[m]]:
      rh=0 (row 2m):   th0->kh2, th1->kh0 ; rh=1 (row 2m+1): th1->kh1.
    Output phases cover 2(H+1); the final network crops to 2H+1.
    """
    w = np.asarray(deconv["w"])                 # (Ci, Co, 3, 3)
    Ci, Co = w.shape[0], w.shape[1]
    kmap = {(0, 0): 2, (0, 1): 0, (1, 1): 1}
    wm = np.zeros((4 * Ci, 4 * Co), np.float32)
    for th in range(2):
        for tw in range(2):
            for rh in range(2):
                for rw in range(2):
                    if (rh, th) in kmap and (rw, tw) in kmap:
                        kh_, kw_ = kmap[(rh, th)], kmap[(rw, tw)]
                        ph = rh * 2 + rw
                        tap = th * 2 + tw
                        wm[tap * Ci:(tap + 1) * Ci,
                           ph * Co:(ph + 1) * Co] = w[:, :, kh_, kw_]
    scale, bias = _fold_bn(Co, deconv["b"], bn)
    packed = _pack_matmul(jnp.asarray(wm), jnp.tile(scale, 4), jnp.tile(bias, 4))
    packed["n_out"] = Co
    return packed


def prep_bottleneck(p):
    q = {
        "stride": p["stride"],
        "conv1": prep_conv2d(p["conv1"], p["bn1"]),
        "conv2": prep_conv2d(p["conv2"], p["bn2"]),
        "conv3": prep_conv2d(p["conv3"], p["bn3"]),
    }
    if "down_conv" in p:
        q["down"] = prep_conv2d(p["down_conv"], p["down_bn"])
    return q


def prep_decoder(p):
    return {
        "conv1": prep_conv2d(p["conv1"], p["bn1"]),
        "deconv2": prep_deconv_k4s2p1(p["deconv2"], p["bn2"]),
        "conv3": prep_conv2d(p["conv3"], p["bn3"]),
    }


def prepare_params(raw):
    prep = {
        "firstconv": prep_conv2d(raw["firstconv"], raw["firstbn"]),
        "finaldeconv1": prep_deconv_k3s2p0(raw["finaldeconv1"], None),
        "finalconv2": prep_conv2d(raw["finalconv2"], None),
        "finalconv3": prep_conv2d(raw["finalconv3"], None),
    }
    for name in ("layer1", "layer2", "layer3", "layer4"):
        prep[name] = [prep_bottleneck(b) for b in raw[name]]
    for name in ("decoder4", "decoder3", "decoder2", "decoder1"):
        prep[name] = prep_decoder(raw[name])
    # decoder0 exists in the PyTorch module but is never used in forward.
    return prep


# ----------------------------------------------------------------------------
# Forward pass
# ----------------------------------------------------------------------------
def conv_apply(x, prep, stride, padding, relu, residual=None):
    return conv2d_prepared(
        x, prep["wp"], prep["sb"], residual,
        kh=prep["kh"], kw=prep["kw"], stride=stride, padding=padding,
        relu=relu, n_out=prep["n_out"], has_res=residual is not None)


def bottleneck_forward(x, p):
    if "down" in p:
        identity = conv_apply(x, p["down"], p["stride"], 0, False)
    else:
        identity = x
    out = conv_apply(x, p["conv1"], 1, 0, True)
    out = conv_apply(out, p["conv2"], p["stride"], 1, True)
    # residual add + ReLU fused into the conv3 matmul epilogue:
    out = conv_apply(out, p["conv3"], 1, 0, True, residual=identity)
    return out


def decoder_forward(x, p):
    x = conv_apply(x, p["conv1"], 1, 0, True)
    d = p["deconv2"]
    x = deconv_k4s2p1_prepared(x, d["wp"], d["sb"], n_out=d["n_out"])
    x = conv_apply(x, p["conv3"], 1, 0, True)
    return x


def linknet152_forward(params, x_nchw, num_classes=1):
    x = jnp.transpose(x_nchw, (0, 2, 3, 1)).astype(jnp.bfloat16)  # NCHW -> NHWC, bf16 once
    # firstconv -> dropout(p=0.8, identity in eval) -> firstbn -> relu (fused)
    x = conv_apply(x, params["firstconv"], 2, 3, True)
    x = max_pool_3x3_s2_p1(x)
    for blk in params["layer1"]:
        x = bottleneck_forward(x, blk)
    for blk in params["layer2"]:
        x = bottleneck_forward(x, blk)
    for blk in params["layer3"]:
        x = bottleneck_forward(x, blk)
    for blk in params["layer4"]:
        x = bottleneck_forward(x, blk)
    e4 = x
    d4 = decoder_forward(e4, params["decoder4"])
    d3 = decoder_forward(d4, params["decoder3"])
    d2 = decoder_forward(d3, params["decoder2"])
    d1 = decoder_forward(d2, params["decoder1"])
    fd = params["finaldeconv1"]
    f1 = deconv_k3s2p0_prepared(d1, fd["wp"], fd["sb"], n_out=fd["n_out"])
    f3 = conv_apply(f1, params["finalconv2"], 1, 0, True)
    f5 = conv_apply(f3, params["finalconv3"], 1, 1, False)
    out = jnp.transpose(f5, (0, 3, 1, 2)).astype(jnp.float32)     # NHWC -> NCHW
    if num_classes > 1:
        out = jax.nn.log_softmax(out, axis=1)
    return out


# ----------------------------------------------------------------------------
# Element-wise verification of the deconv -> pixel-shuffle-conv remaps
# ----------------------------------------------------------------------------
def _ref_conv_transpose(x_nhwc, w, b, stride, padding):
    """PyTorch ConvTranspose2d semantics via lax.conv_general_dilated (NHWC)."""
    kh, kw = w.shape[2], w.shape[3]
    w_hwio = jnp.transpose(w[:, :, ::-1, ::-1], (2, 3, 0, 1))  # (kh,kw,Ci,Co)
    y = jax.lax.conv_general_dilated(
        x_nhwc, w_hwio, window_strides=(1, 1),
        padding=[(kh - 1 - padding, kh - 1 - padding),
                 (kw - 1 - padding, kw - 1 - padding)],
        lhs_dilation=(stride, stride),
        dimension_numbers=("NHWC", "HWIO", "NHWC"))
    return y + b.reshape(1, 1, 1, -1)


def _verify_deconv_paths():
    key = jax.random.PRNGKey(42)
    kx, kw_, kb = jax.random.split(key, 3)
    Ci, Co, H = 8, 8, 5
    x = jax.random.normal(kx, (1, H, H, Ci), jnp.float32)
    xb = x.astype(jnp.bfloat16)
    x32 = xb.astype(jnp.float32)
    cases = ((4, 2, 1, prep_deconv_k4s2p1, deconv_k4s2p1_prepared),
             (3, 2, 0, prep_deconv_k3s2p0, deconv_k3s2p0_prepared))
    for kk, stride, pad, prep_fn, run_fn in cases:
        w = jax.random.normal(kw_, (Ci, Co, kk, kk), jnp.float32) / math.sqrt(Ci * kk * kk)
        b = 0.01 * jax.random.normal(kb, (Co,), jnp.float32)
        w32 = w.astype(jnp.bfloat16).astype(jnp.float32)
        d = prep_fn({"w": w, "b": b}, None)
        got = run_fn(xb, d["wp"], d["sb"], n_out=d["n_out"]).astype(jnp.float32)
        ref = jnp.maximum(_ref_conv_transpose(x32, w32, b, stride, pad), 0.0)
        assert got.shape == ref.shape, (got.shape, ref.shape)
        err = float(jnp.max(jnp.abs(got - ref)))
        assert err < 2e-2, f"deconv k={kk} remap mismatch, max|err|={err}"


if __name__ == "__main__":
    _verify_deconv_paths()
    kg = KeyGen(0)
    raw = init_linknet152(kg, num_classes=1, num_channels=3)
    params = prepare_params(raw)
    x = jax.random.normal(jax.random.PRNGKey(0), (1, 3, 64, 64), jnp.float32)
    y = linknet152_forward(params, x, num_classes=1)
    y = jax.block_until_ready(y)
    assert y.shape == (1, 1, 64, 64), y.shape
    assert bool(jnp.all(jnp.isfinite(y)))
    print("KERNEL_OK")
</pallas_src>

<mosaic_0001>
module attributes {stable_mosaic.version = 11 : i64} {
  func.func @_mm_kernel(%arg0: i32, %arg1: i32, %arg2: memref<32x80xbf16, #tpu.memory_space<vmem>>, %arg3: memref<80x128xbf16, #tpu.memory_space<vmem>>, %arg4: memref<2x128xf32, #tpu.memory_space<vmem>>, %arg5: memref<32x128xbf16, #tpu.memory_space<vmem>>) attributes {dimension_semantics = [#tpu.dimension_semantics<parallel>, #tpu.dimension_semantics<parallel>], iteration_bounds = array<i64: 1, 1>, scalar_prefetch = 0 : i64, scratch_operands = 0 : i64, tpu.core_type = #tpu.core_type<tc>, window_params = [{transform_indices = @transform_0, window_bounds = array<i64: 32, 80>}, {transform_indices = @transform_1, window_bounds = array<i64: 80, 128>}, {transform_indices = @transform_2, window_bounds = array<i64: 2, 128>}, {transform_indices = @transform_3, window_bounds = array<i64: 32, 128>}]} {
    %c0 = arith.constant 0 : index
    %c0_0 = arith.constant 0 : index
    %0 = vector.load %arg2[%c0, %c0_0] : memref<32x80xbf16, #tpu.memory_space<vmem>>, vector<32x80xbf16>
    %c0_1 = arith.constant 0 : index
    %c0_2 = arith.constant 0 : index
    %1 = vector.load %arg3[%c0_1, %c0_2] : memref<80x128xbf16, #tpu.memory_space<vmem>>, vector<80x128xbf16>
    %cst = arith.constant dense<0.000000e+00> : vector<32x128xf32>
    %2 = tpu.matmul %0, %1, %cst {dimension_numbers = #tpu.dot_dimension_numbers<[1], [0], [0], [1], [0, 0, 1, 1], [], []>} : vector<32x80xbf16>, vector<80x128xbf16>, vector<32x128xf32> -> vector<32x128xf32>
    %c0_3 = arith.constant 0 : index
    %c0_4 = arith.constant 0 : index
    %3 = vector.load %arg4[%c0_3, %c0_4] : memref<2x128xf32, #tpu.memory_space<vmem>>, vector<2x128xf32>
    %4 = vector.extract_strided_slice %3 {offsets = [0, 0], sizes = [1, 128], strides = [1, 1]} : vector<2x128xf32> to vector<1x128xf32>
    %5 = vector.broadcast %4 : vector<1x128xf32> to vector<32x128xf32>
    %6 = arith.mulf %2, %5 : vector<32x128xf32>
    %7 = vector.extract_strided_slice %3 {offsets = [1, 0], sizes = [1, 128], strides = [1, 1]} : vector<2x128xf32> to vector<1x128xf32>
    %8 = vector.broadcast %7 : vector<1x128xf32> to vector<32x128xf32>
    %9 = arith.addf %6, %8 : vector<32x128xf32>
    %cst_5 = arith.constant 0.000000e+00 : f32
    %10 = vector.broadcast %cst_5 : f32 to vector<32x128xf32>
    %11 = arith.maximumf %9, %10 : vector<32x128xf32>
    %12 = arith.truncf %11 : vector<32x128xf32> to vector<32x128xbf16>
    %c0_6 = arith.constant 0 : index
    %c0_7 = arith.constant 0 : index
    %13 = vector.load %arg5[%c0_6, %c0_7] : memref<32x128xbf16, #tpu.memory_space<vmem>>, vector<32x128xbf16>
    tpu.vector_store %arg5[%c0_6, %c0_7], %12 {strides = array<i32>} : memref<32x128xbf16, #tpu.memory_space<vmem>>, vector<32x128xbf16>,
    return
  }
  func.func @transform_0(%arg0: i32, %arg1: i32) -> (i32, i32) {
    %c0_i32 = arith.constant 0 : i32
    %c0_i32_0 = arith.constant 0 : i32
    return %arg0, %c0_i32 : i32, i32
  }
  func.func @transform_1(%arg0: i32, %arg1: i32) -> (i32, i32) {
    %c0_i32 = arith.constant 0 : i32
    %c0_i32_0 = arith.constant 0 : i32
    return %c0_i32, %arg1 : i32, i32
  }
  func.func @transform_2(%arg0: i32, %arg1: i32) -> (i32, i32) {
    %c0_i32 = arith.constant 0 : i32
    %c0_i32_0 = arith.constant 0 : i32
    return %c0_i32, %arg1 : i32, i32
  }
  func.func @transform_3(%arg0: i32, %arg1: i32) -> (i32, i32) {
    %c0_i32 = arith.constant 0 : i32
    return %arg0, %arg1 : i32, i32
  }
}

</mosaic_0001>

<llo_original>
// kernel: deconv_k4s2p1_prepared.1
$region0: #{deconv_k4s2p1_prepared.1}
  #allocation0 [shape = 'u32[]', space=smem, size = 0x4, offset = 0x4, fixed_abs, tag = 'smem constant byte address 0x4 - core index']
  #allocation1 [shape = 'u32[72,128]{1,0:T(1,128)}', space=vmem, size = 0x9000, scoped, tag = 'internal scratch']
  %s0 = inlined_call_operand.vmem [shape: bf16[32,80], index: 0, kind: input, shape index: {}]
  %s1 = inlined_call_operand.vmem [shape: bf16[80,128], index: 1, kind: input, shape index: {}]
  %s2 = inlined_call_operand.vmem [shape: f32[2,128], index: 2, kind: input, shape index: {}]
  %s3 = inlined_call_operand.vmem [shape: bf16[32,128], index: 3, kind: output, shape index: {}]
  %s4 = sld [smem:[#allocation0]]
  $region22: #{deconv_k4s2p1_prepared.1} parent=0
    _
  %s6 = ssub.s32 1, %s4
  %s7 = scalar_select 0, %s6, %s4
  // Predicated region
  $region2: #{deconv_k4s2p1_prepared.1} parent=0 // pred_check
    _
  $region3: #{deconv_k4s2p1_prepared.1} parent=0 // pred_check_branch
    %9 = sbr.rel (0) target = $region5
  $region4: #{deconv_k4s2p1_prepared.1} parent=0 // pred_region
    _
  $region5: #{deconv_k4s2p1_prepared.1} parent=0 // pred_fallthru
    _
  // Predicated region
  $region6: #{deconv_k4s2p1_prepared.1} parent=0 // pred_check
    _
  $region7: #{deconv_k4s2p1_prepared.1} parent=0 // pred_check_branch
    %11 = sbr.rel (0) target = $region9
  $region8: #{deconv_k4s2p1_prepared.1} parent=0 // pred_region
    _
  $region9: #{deconv_k4s2p1_prepared.1} parent=0 // pred_fallthru
    _
  // Predicated region
  $region10: #{deconv_k4s2p1_prepared.1} parent=0 // pred_check
    _
  $region11: #{deconv_k4s2p1_prepared.1} parent=0 // pred_check_branch
    %13 = sbr.rel (0) target = $region13
  $region12: #{deconv_k4s2p1_prepared.1} parent=0 // pred_region
    _
  $region13: #{deconv_k4s2p1_prepared.1} parent=0 // pred_fallthru
    _
  %v15 = vld [vmem:[%s0] sm:$0xf]
  %v16 = vld [vmem:[%s0 + $0x4] sm:$0xf]
  %v17 = vld [vmem:[%s0 + $0x8] sm:$0xf]
  %v18 = vld [vmem:[%s0 + $0xc] sm:$0xf]
  %v19 = vld [vmem:[%s1] sm:$0xf]
  %v20 = vld [vmem:[%s1 + $0x4] sm:$0xf]
  %v21 = vld [vmem:[%s1 + $0x8] sm:$0xf]
  %v22 = vld [vmem:[%s1 + $0xc] sm:$0xf]
  %v23 = vld [vmem:[%s1 + $0x10] sm:$0xf]
  %v24 = vld [vmem:[%s1 + $0x14] sm:$0xf]
  %v25 = vld [vmem:[%s1 + $0x18] sm:$0xf]
  %v26 = vld [vmem:[%s1 + $0x1c] sm:$0xf]
  %v27 = vld [vmem:[%s1 + $0x20] sm:$0xf]
  %v28 = vld [vmem:[%s1 + $0x24] sm:$0xf]
  %v33 = vunpack.c.l.b16 %v15
  %v34 = vunpack.c.l.b16 %v16
  %v35 = vunpack.c.l.b16 %v17
  %v36 = vunpack.c.l.b16 %v18
  %v37 = vpack.c.b16 %v34, %v33
  %v38 = vpack.c.b16 %v36, %v35
  %v49 = vunpack.c.l.b16 %v19
  %v50 = vunpack.c.l.b16 %v20
  %v51 = vunpack.c.l.b16 %v21
  %v52 = vunpack.c.l.b16 %v22
  %v53 = vunpack.c.l.b16 %v23
  %v54 = vunpack.c.l.b16 %v24
  %v55 = vunpack.c.l.b16 %v25
  %v56 = vunpack.c.l.b16 %v26
  %v57 = vunpack.c.l.b16 %v27
  %v58 = vunpack.c.l.b16 %v28
  %v59 = vpack.c.b16 %v50, %v49
  %v60 = vpack.c.b16 %v52, %v51
  %v61 = vpack.c.b16 %v54, %v53
  %v62 = vpack.c.b16 %v56, %v55
  %v63 = vpack.c.b16 %v58, %v57
  %vm69 = vcmask 654336
  %v71 = vsel %vm69, %v37, 0
  %v74 = vsel %vm69, %v38, 0
  %76 = vmatpush.bf16.msra.mxu0 0
  %77 = vmatpush.bf16.msra.mxu0 0
  %78 = vmatpush.bf16.msra.mxu0 0
  %79 = vmatpush.bf16.msra.mxu0 %v63
  %80 = vmatpush.bf16.msra.mxu0 %v62
  %81 = vmatpush.bf16.msra.mxu0 %v61
  %82 = vmatpush.bf16.msra.mxu0 %v60
  %83 = vmatpush.bf16.msra.mxu0 %v59
  %84 = vmatmul.bf16.gmra.mxu0 %v71
  %v85 = vpop.f32.mrf.mxu0
  %v86 = vadd.f32 0.0, %v85
  %v87 = vpop.f32.mrf.mxu0
  %v88 = vadd.f32 0.0, %v87
  %89 = vmatmul.bf16.gmra.mxu0 %v74
  %v90 = vpop.f32.mrf.mxu0
  %v91 = vadd.f32 0.0, %v90
  %v92 = vpop.f32.mrf.mxu0
  %v93 = vadd.f32 0.0, %v92
  %94 = vdwg.mxu0
  %v95 = vld [vmem:[%s2] sm:$0x3]
  %v96 = vperm.slane %v95, 0
  %v97 = vmul.f32 %v86, %v96
  %v98 = vmul.f32 %v88, %v96
  %v99 = vmul.f32 %v91, %v96
  %v100 = vmul.f32 %v93, %v96
  %v101 = vperm.slane %v95, 1
  %v102 = vadd.f32 %v97, %v101
  %v103 = vadd.f32 %v98, %v101
  %v104 = vadd.f32 %v99, %v101
  %v105 = vadd.f32 %v100, %v101
  %v106 = vmax.f32 %v102, 0.0
  %v107 = vmax.f32 %v103, 0.0
  %v108 = vmax.f32 %v104, 0.0
  %v109 = vmax.f32 %v105, 0.0
  %v110 = vpack.c.bf16 %v106, %v106
  %v111 = vpack.c.bf16 %v107, %v107
  %v112 = vpack.c.bf16 %v108, %v108
  %v113 = vpack.c.bf16 %v109, %v109
  %114 = vst [vmem:[%s3] sm:$0xf] %v110
  %115 = vst [vmem:[%s3 + $0x4] sm:$0xf] %v111
  %116 = vst [vmem:[%s3 + $0x8] sm:$0xf] %v112
  %117 = vst [vmem:[%s3 + $0xc] sm:$0xf] %v113
  // Predicated region
  $region14: #{deconv_k4s2p1_prepared.1} parent=0 // pred_check
    _
  $region15: #{deconv_k4s2p1_prepared.1} parent=0 // pred_check_branch
    %119 = sbr.rel (0) target = $region17
  $region16: #{deconv_k4s2p1_prepared.1} parent=0 // pred_region
    _
  $region17: #{deconv_k4s2p1_prepared.1} parent=0 // pred_fallthru
    _
  // Predicated region
  $region18: #{deconv_k4s2p1_prepared.1} parent=0 // pred_check
    _
  $region19: #{deconv_k4s2p1_prepared.1} parent=0 // pred_check_branch
    %121 = sbr.rel (0) target = $region21
  $region20: #{deconv_k4s2p1_prepared.1} parent=0 // pred_region
    _
  $region21: #{deconv_k4s2p1_prepared.1} parent=0 // pred_fallthru
    _

</llo_original>
